<compile_context>
chip_gen: v7x
topology: tpu7x:2x2x1
jax: 0.10.0
libtpu: 0.0.40
codegen_flags: <defaults>
</compile_context>

<pallas_src>
import functools

import jax
import jax.numpy as jnp
from jax.experimental import pallas as pl
from jax.experimental.pallas import tpu as pltpu

NEG_SLOPE = 0.2
EPS = 1e-5      # PyTorch InstanceNorm2d default eps
K = 3
STRIDE = 2
PAD = 1


def _round_up(a, b):
    return (a + b - 1) // b * b


def _convbnr_kernel(x_ref, w_ref, mask_ref, o_ref,
                    act_ref, rhs_ref, s1_ref, s2_ref, *,
                    wp2, n_valid, tl, tlw, n_l):
    # Grid = (N, n_co, pass, n_l); N is the only megacore-parallel axis.
    #   x_ref    (4, C_in_p, L)          bf16  space-to-depth'd zero-padded input
    #   w_ref    (tco, 9*C_in_p)         bf16  tap-folded conv weights
    #   mask_ref (1, tl)                 f32   1.0 on valid output lanes
    #   o_ref    (tco, tl)               bf16  normalized output tile
    #   act_ref  (n_l*4, C_in_p, tlw)    bf16  LeakyReLU(x), paneled per lane tile
    #   rhs_ref  (9*C_in_p, tl)          bf16  folded matmul RHS
    #   s1_ref/s2_ref (tco, 1)           f32   sum / sumsq, then mean / rstd
    co = pl.program_id(1)
    p = pl.program_id(2)
    l = pl.program_id(3)
    cin_p = x_ref.shape[1]

    # ---- LeakyReLU once per batch item (first grid step for this n). -------
    # Safe w.r.t. megacore because only the N axis is "parallel": every core
    # starts each of its n's at (co=0, p=0, l=0).
    @pl.when((co == 0) & (p == 0) & (l == 0))
    def _():
        for pnl in range(n_l):                      # static unroll
            for par in range(4):
                xw = x_ref[par, :, pnl * tl:pnl * tl + tlw]
                act_ref[pnl * 4 + par] = jnp.maximum(xw, NEG_SLOPE * xw)

    # ---- Conv tile: 9 taps folded into one 144-deep MXU contraction. -------
    for par in range(4):
        win = act_ref[l * 4 + par]                  # (cin_p, tlw)
        for ki in range(K):
            for kj in range(K):
                if 2 * (ki % 2) + (kj % 2) != par:
                    continue
                off = (ki // 2) * wp2 + (kj // 2)
                t = ki * K + kj
                rhs_ref[t * cin_p:(t + 1) * cin_p, :] = win[:, off:off + tl]
    acc = jnp.dot(w_ref[...], rhs_ref[...], preferred_element_type=jnp.float32)

    # ---- Pass 0: masked per-channel sum / sumsq; finalize mean / rstd. -----
    @pl.when(p == 0)
    def _():
        @pl.when(l == 0)
        def _():
            s1_ref[...] = jnp.zeros_like(s1_ref)
            s2_ref[...] = jnp.zeros_like(s2_ref)

        masked = acc * mask_ref[...]
        s1_ref[...] += jnp.sum(masked, axis=-1, keepdims=True)
        s2_ref[...] += jnp.sum(masked * acc, axis=-1, keepdims=True)

        @pl.when(l == n_l - 1)
        def _():
            inv_n = 1.0 / n_valid
            mean = s1_ref[...] * inv_n
            var = jnp.maximum(s2_ref[...] * inv_n - mean * mean, 0.0)
            s1_ref[...] = mean                      # reuse scratch: mean
            s2_ref[...] = jax.lax.rsqrt(var + EPS)  # reuse scratch: rstd

    # ---- Pass 1: recompute tile (acc above), normalize, write bf16. --------
    @pl.when(p == 1)
    def _():
        o_ref[...] = ((acc - s1_ref[...]) * s2_ref[...]).astype(o_ref.dtype)


def convbnr_forward(x, w, b=None):
    # `b` (conv bias) is accepted for API parity but unused: InstanceNorm2d
    # with affine=False removes any per-channel constant shift exactly.
    del b
    N, C_in, H, W = x.shape
    C_out = w.shape[0]

    Ho = (H + 2 * PAD - K) // STRIDE + 1
    Wo = (W + 2 * PAD - K) // STRIDE + 1
    Hp2, Wp2 = Ho + 1, Wo + 1                      # per-parity spatial extents

    C_in_p = _round_up(C_in, 16)                   # bf16 sublane packing
    C_out_p = _round_up(C_out, 8)
    tco = min(C_out_p, 128)                        # C_out tile
    C_out_p = _round_up(C_out_p, tco)

    l_raw = Ho * Wp2                               # flattened output lanes
    tl = min(512, _round_up(l_raw, 128))           # spatial tile (lane-dense)
    lout = _round_up(l_raw, tl)
    n_l = lout // tl
    tlw = tl + _round_up(Wp2 + 1, 128)             # per-panel window (all taps fit)
    L = lout - tl + tlw                            # padded slab lane width

    # ---- layout-only glue in plain JAX (no arithmetic, no replication) -----
    xp = jnp.pad(x, ((0, 0), (0, 0),
                     (PAD, 2 * Hp2 - H - PAD), (PAD, 2 * Wp2 - W - PAD)))
    xs = xp.reshape(N, C_in, Hp2, 2, Wp2, 2)
    xs = xs.transpose(0, 3, 5, 1, 2, 4).reshape(N, 4, C_in, Hp2 * Wp2)
    xs = jnp.pad(xs, ((0, 0), (0, 0), (0, C_in_p - C_in), (0, L - Hp2 * Wp2)))
    xs = xs.astype(jnp.bfloat16)

    # Tap-folded weights: (C_out_p, K*K*C_in_p), tap-major, channel-minor.
    wt = jnp.transpose(w, (0, 2, 3, 1))                      # (C_out, K, K, C_in)
    wt = jnp.pad(wt, ((0, C_out_p - C_out), (0, 0), (0, 0), (0, C_in_p - C_in)))
    wt = wt.reshape(C_out_p, K * K * C_in_p).astype(jnp.bfloat16)

    # Valid-lane mask for the flattened (Ho, Wp2) output layout.
    q = jnp.arange(lout)
    mask = ((q < Ho * Wp2) & ((q % Wp2) < Wo)).astype(jnp.float32).reshape(1, lout)

    kernel = functools.partial(_convbnr_kernel, wp2=Wp2, n_valid=Ho * Wo,
                               tl=tl, tlw=tlw, n_l=n_l)

    out = pl.pallas_call(
        kernel,
        out_shape=jax.ShapeDtypeStruct((N, C_out_p, lout), jnp.bfloat16),
        grid=(N, C_out_p // tco, 2, n_l),
        in_specs=[
            pl.BlockSpec((None, 4, C_in_p, L), lambda n, co, p, l: (n, 0, 0, 0)),
            pl.BlockSpec((tco, K * K * C_in_p), lambda n, co, p, l: (co, 0)),
            pl.BlockSpec((1, tl), lambda n, co, p, l: (0, l)),
        ],
        # Pass 0 never writes; map all its steps to block (n, co, 0) so the
        # only HBM writebacks are the pass-1 tiles.
        out_specs=pl.BlockSpec((None, tco, tl), lambda n, co, p, l: (n, co, l * p)),
        scratch_shapes=[
            pltpu.VMEM((n_l * 4, C_in_p, tlw), jnp.bfloat16),   # LeakyReLU(x) panels
            pltpu.VMEM((K * K * C_in_p, tl), jnp.bfloat16),     # folded RHS
            pltpu.VMEM((tco, 1), jnp.float32),                  # sum   -> mean
            pltpu.VMEM((tco, 1), jnp.float32),                  # sumsq -> rstd
        ],
        compiler_params=pltpu.CompilerParams(
            dimension_semantics=("parallel", "arbitrary", "arbitrary", "arbitrary")),
    )(xs, wt, mask)

    # Crop the lane/channel padding: (N, C_out_p, lout) -> (N, C_out, Ho, Wo).
    out = out[:, :C_out, :Ho * Wp2].reshape(N, C_out, Ho, Wp2)
    return out[:, :, :, :Wo].astype(x.dtype)


def convbnr_reference(x, w, b):
    # Pure-JAX f32 reference mirroring the PyTorch forward (including bias,
    # which the kernel drops because InstanceNorm cancels it exactly).
    a = jnp.where(x >= 0, x, NEG_SLOPE * x)
    y = jax.lax.conv_general_dilated(
        a, w, window_strides=(STRIDE, STRIDE),
        padding=((PAD, PAD), (PAD, PAD)),
        dimension_numbers=("NCHW", "OIHW", "NCHW"))
    y = y + b.reshape(1, -1, 1, 1)
    mean = jnp.mean(y, axis=(2, 3), keepdims=True)
    var = jnp.mean((y - mean) ** 2, axis=(2, 3), keepdims=True)
    return (y - mean) / jnp.sqrt(var + EPS)


if __name__ == "__main__":
    key = jax.random.PRNGKey(0)
    kx, kw, kb = jax.random.split(key, 3)

    N, C_in, H, W = 2, 4, 16, 16
    C_out = 8

    x = jax.random.normal(kx, (N, C_in, H, W), dtype=jnp.float32)
    weight = 0.1 * jax.random.normal(kw, (C_out, C_in, K, K), dtype=jnp.float32)
    bias = 0.1 * jax.random.normal(kb, (C_out,), dtype=jnp.float32)

    out = jax.block_until_ready(convbnr_forward(x, weight, bias))
    ref = convbnr_reference(x, weight, bias)

    assert out.shape == (N, C_out, H // 2, W // 2), out.shape
    # bf16 MXU operands + bf16 output (f32 accumulate / norm) => compare
    # against the f32 reference with a tolerance that covers bf16 rounding.
    max_err = float(jnp.max(jnp.abs(out - ref)))
    assert jnp.allclose(out, ref, atol=5e-2, rtol=5e-2), f"max_err={max_err}"

    print("KERNEL_OK")
</pallas_src>

<mosaic_0001>
module attributes {stable_mosaic.version = 11 : i64} {
  func.func @_convbnr_kernel(%arg0: i32, %arg1: i32, %arg2: i32, %arg3: i32, %arg4: memref<1x4x16x256xbf16, #tpu.memory_space<vmem>>, %arg5: memref<8x144xbf16, #tpu.memory_space<vmem>>, %arg6: memref<1x128xf32, #tpu.memory_space<vmem>>, %arg7: memref<1x8x128xbf16, #tpu.memory_space<vmem>>, %arg8: memref<4x16x256xbf16, #tpu.memory_space<vmem>>, %arg9: memref<144x128xbf16, #tpu.memory_space<vmem>>, %arg10: memref<8x1xf32, #tpu.memory_space<vmem>>, %arg11: memref<8x1xf32, #tpu.memory_space<vmem>>) attributes {dimension_semantics = [#tpu.dimension_semantics<parallel>, #tpu.dimension_semantics<arbitrary>, #tpu.dimension_semantics<arbitrary>, #tpu.dimension_semantics<arbitrary>], iteration_bounds = array<i64: 2, 1, 2, 1>, scalar_prefetch = 0 : i64, scratch_operands = 4 : i64, tpu.core_type = #tpu.core_type<tc>, window_params = [{transform_indices = @transform_0, window_bounds = array<i64: 1, 4, 16, 256>}, {transform_indices = @transform_1, window_bounds = array<i64: 8, 144>}, {transform_indices = @transform_2, window_bounds = array<i64: 1, 128>}, {transform_indices = @transform_3, window_bounds = array<i64: 1, 8, 128>}]} {
    %c0_i32 = arith.constant 0 : i32
    %0 = arith.cmpi eq, %arg1, %c0_i32 : i32
    %c0_i32_0 = arith.constant 0 : i32
    %1 = arith.cmpi eq, %arg2, %c0_i32_0 : i32
    %2 = arith.andi %0, %1 : i1
    %c0_i32_1 = arith.constant 0 : i32
    %3 = arith.cmpi eq, %arg3, %c0_i32_1 : i32
    %4 = arith.andi %2, %3 : i1
    %5 = arith.extui %4 : i1 to i32
    %c0_i32_2 = arith.constant 0 : i32
    %6 = arith.cmpi ne, %5, %c0_i32_2 : i32
    scf.if %6 {
      %c0_32 = arith.constant 0 : index
      %c0_33 = arith.constant 0 : index
      %c0_34 = arith.constant 0 : index
      %c0_35 = arith.constant 0 : index
      %54 = vector.load %arg4[%c0_32, %c0_33, %c0_34, %c0_35] : memref<1x4x16x256xbf16, #tpu.memory_space<vmem>>, vector<1x1x16x256xbf16>
      %55 = vector.shape_cast %54 : vector<1x1x16x256xbf16> to vector<16x256xbf16>
      %cst_36 = arith.constant 2.001950e-01 : bf16
      %56 = vector.broadcast %cst_36 : bf16 to vector<16x256xbf16>
      %57 = arith.mulf %56, %55 : vector<16x256xbf16>
      %58 = arith.maximumf %55, %57 : vector<16x256xbf16>
      %c0_37 = arith.constant 0 : index
      %c0_38 = arith.constant 0 : index
      %c0_39 = arith.constant 0 : index
      %59 = vector.load %arg8[%c0_37, %c0_38, %c0_39] : memref<4x16x256xbf16, #tpu.memory_space<vmem>>, vector<1x16x256xbf16>
      %60 = vector.shape_cast %59 : vector<1x16x256xbf16> to vector<16x256xbf16>
      %61 = vector.shape_cast %58 : vector<16x256xbf16> to vector<1x16x256xbf16>
      tpu.vector_store %arg8[%c0_37, %c0_38, %c0_39], %61 {strides = array<i32>} : memref<4x16x256xbf16, #tpu.memory_space<vmem>>, vector<1x16x256xbf16>,
      %c0_40 = arith.constant 0 : index
      %c1 = arith.constant 1 : index
      %c0_41 = arith.constant 0 : index
      %c0_42 = arith.constant 0 : index
      %62 = vector.load %arg4[%c0_40, %c1, %c0_41, %c0_42] : memref<1x4x16x256xbf16, #tpu.memory_space<vmem>>, vector<1x1x16x256xbf16>
      %63 = vector.shape_cast %62 : vector<1x1x16x256xbf16> to vector<16x256xbf16>
      %cst_43 = arith.constant 2.001950e-01 : bf16
      %64 = vector.broadcast %cst_43 : bf16 to vector<16x256xbf16>
      %65 = arith.mulf %64, %63 : vector<16x256xbf16>
      %66 = arith.maximumf %63, %65 : vector<16x256xbf16>
      %c1_44 = arith.constant 1 : index
      %c0_45 = arith.constant 0 : index
      %c0_46 = arith.constant 0 : index
      %67 = vector.load %arg8[%c1_44, %c0_45, %c0_46] : memref<4x16x256xbf16, #tpu.memory_space<vmem>>, vector<1x16x256xbf16>
      %68 = vector.shape_cast %67 : vector<1x16x256xbf16> to vector<16x256xbf16>
      %69 = vector.shape_cast %66 : vector<16x256xbf16> to vector<1x16x256xbf16>
      tpu.vector_store %arg8[%c1_44, %c0_45, %c0_46], %69 {strides = array<i32>} : memref<4x16x256xbf16, #tpu.memory_space<vmem>>, vector<1x16x256xbf16>,
      %c0_47 = arith.constant 0 : index
      %c2 = arith.constant 2 : index
      %c0_48 = arith.constant 0 : index
      %c0_49 = arith.constant 0 : index
      %70 = vector.load %arg4[%c0_47, %c2, %c0_48, %c0_49] : memref<1x4x16x256xbf16, #tpu.memory_space<vmem>>, vector<1x1x16x256xbf16>
      %71 = vector.shape_cast %70 : vector<1x1x16x256xbf16> to vector<16x256xbf16>
      %cst_50 = arith.constant 2.001950e-01 : bf16
      %72 = vector.broadcast %cst_50 : bf16 to vector<16x256xbf16>
      %73 = arith.mulf %72, %71 : vector<16x256xbf16>
      %74 = arith.maximumf %71, %73 : vector<16x256xbf16>
      %c2_51 = arith.constant 2 : index
      %c0_52 = arith.constant 0 : index
      %c0_53 = arith.constant 0 : index
      %75 = vector.load %arg8[%c2_51, %c0_52, %c0_53] : memref<4x16x256xbf16, #tpu.memory_space<vmem>>, vector<1x16x256xbf16>
      %76 = vector.shape_cast %75 : vector<1x16x256xbf16> to vector<16x256xbf16>
      %77 = vector.shape_cast %74 : vector<16x256xbf16> to vector<1x16x256xbf16>
      tpu.vector_store %arg8[%c2_51, %c0_52, %c0_53], %77 {strides = array<i32>} : memref<4x16x256xbf16, #tpu.memory_space<vmem>>, vector<1x16x256xbf16>,
      %c0_54 = arith.constant 0 : index
      %c3 = arith.constant 3 : index
      %c0_55 = arith.constant 0 : index
      %c0_56 = arith.constant 0 : index
      %78 = vector.load %arg4[%c0_54, %c3, %c0_55, %c0_56] : memref<1x4x16x256xbf16, #tpu.memory_space<vmem>>, vector<1x1x16x256xbf16>
      %79 = vector.shape_cast %78 : vector<1x1x16x256xbf16> to vector<16x256xbf16>
      %cst_57 = arith.constant 2.001950e-01 : bf16
      %80 = vector.broadcast %cst_57 : bf16 to vector<16x256xbf16>
      %81 = arith.mulf %80, %79 : vector<16x256xbf16>
      %82 = arith.maximumf %79, %81 : vector<16x256xbf16>
      %c3_58 = arith.constant 3 : index
      %c0_59 = arith.constant 0 : index
      %c0_60 = arith.constant 0 : index
      %83 = vector.load %arg8[%c3_58, %c0_59, %c0_60] : memref<4x16x256xbf16, #tpu.memory_space<vmem>>, vector<1x16x256xbf16>
      %84 = vector.shape_cast %83 : vector<1x16x256xbf16> to vector<16x256xbf16>
      %85 = vector.shape_cast %82 : vector<16x256xbf16> to vector<1x16x256xbf16>
      tpu.vector_store %arg8[%c3_58, %c0_59, %c0_60], %85 {strides = array<i32>} : memref<4x16x256xbf16, #tpu.memory_space<vmem>>, vector<1x16x256xbf16>,
    } else {
    }
    %c4_i32 = arith.constant 4 : i32
    %7 = arith.muli %arg3, %c4_i32 : i32
    %c0_i32_3 = arith.constant 0 : i32
    %8 = arith.addi %7, %c0_i32_3 : i32
    %9 = arith.index_cast %8 : i32 to index
    %c0 = arith.constant 0 : index
    %c0_4 = arith.constant 0 : index
    %10 = vector.load %arg8[%9, %c0, %c0_4] : memref<4x16x256xbf16, #tpu.memory_space<vmem>>, vector<1x16x256xbf16>
    %11 = vector.shape_cast %10 : vector<1x16x256xbf16> to vector<16x256xbf16>
    %12 = vector.extract_strided_slice %11 {offsets = [0, 0], sizes = [16, 128], strides = [1, 1]} : vector<16x256xbf16> to vector<16x128xbf16>
    %c0_5 = arith.constant 0 : index
    %c0_6 = arith.constant 0 : index
    %13 = vector.load %arg9[%c0_5, %c0_6] : memref<144x128xbf16, #tpu.memory_space<vmem>>, vector<16x128xbf16>
    tpu.vector_store %arg9[%c0_5, %c0_6], %12 {strides = array<i32>} : memref<144x128xbf16, #tpu.memory_space<vmem>>, vector<16x128xbf16>,
    %14 = vector.extract_strided_slice %11 {offsets = [0, 1], sizes = [16, 128], strides = [1, 1]} : vector<16x256xbf16> to vector<16x128xbf16>
    %c32 = arith.constant 32 : index
    %c0_7 = arith.constant 0 : index
    %15 = vector.load %arg9[%c32, %c0_7] : memref<144x128xbf16, #tpu.memory_space<vmem>>, vector<16x128xbf16>
    tpu.vector_store %arg9[%c32, %c0_7], %14 {strides = array<i32>} : memref<144x128xbf16, #tpu.memory_space<vmem>>, vector<16x128xbf16>,
    %16 = vector.extract_strided_slice %11 {offsets = [0, 9], sizes = [16, 128], strides = [1, 1]} : vector<16x256xbf16> to vector<16x128xbf16>
    %c96 = arith.constant 96 : index
    %c0_8 = arith.constant 0 : index
    %17 = vector.load %arg9[%c96, %c0_8] : memref<144x128xbf16, #tpu.memory_space<vmem>>, vector<16x128xbf16>
    tpu.vector_store %arg9[%c96, %c0_8], %16 {strides = array<i32>} : memref<144x128xbf16, #tpu.memory_space<vmem>>, vector<16x128xbf16>,
    %18 = vector.extract_strided_slice %11 {offsets = [0, 10], sizes = [16, 128], strides = [1, 1]} : vector<16x256xbf16> to vector<16x128xbf16>
    %c128 = arith.constant 128 : index
    %c0_9 = arith.constant 0 : index
    %19 = vector.load %arg9[%c128, %c0_9] : memref<144x128xbf16, #tpu.memory_space<vmem>>, vector<16x128xbf16>
    tpu.vector_store %arg9[%c128, %c0_9], %18 {strides = array<i32>} : memref<144x128xbf16, #tpu.memory_space<vmem>>, vector<16x128xbf16>,
    %c4_i32_10 = arith.constant 4 : i32
    %20 = arith.muli %arg3, %c4_i32_10 : i32
    %c1_i32 = arith.constant 1 : i32
    %21 = arith.addi %20, %c1_i32 : i32
    %22 = arith.index_cast %21 : i32 to index
    %c0_11 = arith.constant 0 : index
    %c0_12 = arith.constant 0 : index
    %23 = vector.load %arg8[%22, %c0_11, %c0_12] : memref<4x16x256xbf16, #tpu.memory_space<vmem>>, vector<1x16x256xbf16>
    %24 = vector.shape_cast %23 : vector<1x16x256xbf16> to vector<16x256xbf16>
    %25 = vector.extract_strided_slice %24 {offsets = [0, 0], sizes = [16, 128], strides = [1, 1]} : vector<16x256xbf16> to vector<16x128xbf16>
    %c16 = arith.constant 16 : index
    %c0_13 = arith.constant 0 : index
    %26 = vector.load %arg9[%c16, %c0_13] : memref<144x128xbf16, #tpu.memory_space<vmem>>, vector<16x128xbf16>
    tpu.vector_store %arg9[%c16, %c0_13], %25 {strides = array<i32>} : memref<144x128xbf16, #tpu.memory_space<vmem>>, vector<16x128xbf16>,
    %27 = vector.extract_strided_slice %24 {offsets = [0, 9], sizes = [16, 128], strides = [1, 1]} : vector<16x256xbf16> to vector<16x128xbf16>
    %c112 = arith.constant 112 : index
    %c0_14 = arith.constant 0 : index
    %28 = vector.load %arg9[%c112, %c0_14] : memref<144x128xbf16, #tpu.memory_space<vmem>>, vector<16x128xbf16>
    tpu.vector_store %arg9[%c112, %c0_14], %27 {strides = array<i32>} : memref<144x128xbf16, #tpu.memory_space<vmem>>, vector<16x128xbf16>,
    %c4_i32_15 = arith.constant 4 : i32
    %29 = arith.muli %arg3, %c4_i32_15 : i32
    %c2_i32 = arith.constant 2 : i32
    %30 = arith.addi %29, %c2_i32 : i32
    %31 = arith.index_cast %30 : i32 to index
    %c0_16 = arith.constant 0 : index
    %c0_17 = arith.constant 0 : index
    %32 = vector.load %arg8[%31, %c0_16, %c0_17] : memref<4x16x256xbf16, #tpu.memory_space<vmem>>, vector<1x16x256xbf16>
    %33 = vector.shape_cast %32 : vector<1x16x256xbf16> to vector<16x256xbf16>
    %34 = vector.extract_strided_slice %33 {offsets = [0, 0], sizes = [16, 128], strides = [1, 1]} : vector<16x256xbf16> to vector<16x128xbf16>
    %c48 = arith.constant 48 : index
    %c0_18 = arith.constant 0 : index
    %35 = vector.load %arg9[%c48, %c0_18] : memref<144x128xbf16, #tpu.memory_space<vmem>>, vector<16x128xbf16>
    tpu.vector_store %arg9[%c48, %c0_18], %34 {strides = array<i32>} : memref<144x128xbf16, #tpu.memory_space<vmem>>, vector<16x128xbf16>,
    %36 = vector.extract_strided_slice %33 {offsets = [0, 1], sizes = [16, 128], strides = [1, 1]} : vector<16x256xbf16> to vector<16x128xbf16>
    %c80 = arith.constant 80 : index
    %c0_19 = arith.constant 0 : index
    %37 = vector.load %arg9[%c80, %c0_19] : memref<144x128xbf16, #tpu.memory_space<vmem>>, vector<16x128xbf16>
    tpu.vector_store %arg9[%c80, %c0_19], %36 {strides = array<i32>} : memref<144x128xbf16, #tpu.memory_space<vmem>>, vector<16x128xbf16>,
    %c4_i32_20 = arith.constant 4 : i32
    %38 = arith.muli %arg3, %c4_i32_20 : i32
    %c3_i32 = arith.constant 3 : i32
    %39 = arith.addi %38, %c3_i32 : i32
    %40 = arith.index_cast %39 : i32 to index
    %c0_21 = arith.constant 0 : index
    %c0_22 = arith.constant 0 : index
    %41 = vector.load %arg8[%40, %c0_21, %c0_22] : memref<4x16x256xbf16, #tpu.memory_space<vmem>>, vector<1x16x256xbf16>
    %42 = vector.shape_cast %41 : vector<1x16x256xbf16> to vector<16x256xbf16>
    %43 = vector.extract_strided_slice %42 {offsets = [0, 0], sizes = [16, 128], strides = [1, 1]} : vector<16x256xbf16> to vector<16x128xbf16>
    %c64 = arith.constant 64 : index
    %c0_23 = arith.constant 0 : index
    %44 = vector.load %arg9[%c64, %c0_23] : memref<144x128xbf16, #tpu.memory_space<vmem>>, vector<16x128xbf16>
    tpu.vector_store %arg9[%c64, %c0_23], %43 {strides = array<i32>} : memref<144x128xbf16, #tpu.memory_space<vmem>>, vector<16x128xbf16>,
    %c0_24 = arith.constant 0 : index
    %c0_25 = arith.constant 0 : index
    %45 = vector.load %arg5[%c0_24, %c0_25] : memref<8x144xbf16, #tpu.memory_space<vmem>>, vector<8x144xbf16>
    %c0_26 = arith.constant 0 : index
    %c0_27 = arith.constant 0 : index
    %46 = vector.load %arg9[%c0_26, %c0_27] : memref<144x128xbf16, #tpu.memory_space<vmem>>, vector<144x128xbf16>
    %cst = arith.constant dense<0.000000e+00> : vector<8x128xf32>
    %47 = tpu.matmul %45, %46, %cst {dimension_numbers = #tpu.dot_dimension_numbers<[1], [0], [0], [1], [0, 0, 1, 1], [], []>} : vector<8x144xbf16>, vector<144x128xbf16>, vector<8x128xf32> -> vector<8x128xf32>
    %c0_i32_28 = arith.constant 0 : i32
    %48 = arith.cmpi eq, %arg2, %c0_i32_28 : i32
    %49 = arith.extui %48 : i1 to i32
    %c0_i32_29 = arith.constant 0 : i32
    %50 = arith.cmpi ne, %49, %c0_i32_29 : i32
    scf.if %50 {
      %c0_i32_32 = arith.constant 0 : i32
      %54 = arith.cmpi eq, %arg3, %c0_i32_32 : i32
      %55 = arith.extui %54 : i1 to i32
      %c0_i32_33 = arith.constant 0 : i32
      %56 = arith.cmpi ne, %55, %c0_i32_33 : i32
      scf.if %56 {
        %cst_48 = arith.constant 0.000000e+00 : f32
        %74 = vector.broadcast %cst_48 : f32 to vector<8x1xf32>
        %c0_49 = arith.constant 0 : index
        %c0_50 = arith.constant 0 : index
        %75 = vector.load %arg10[%c0_49, %c0_50] : memref<8x1xf32, #tpu.memory_space<vmem>>, vector<8x1xf32>
        tpu.vector_store %arg10[%c0_49, %c0_50], %74 {strides = array<i32>} : memref<8x1xf32, #tpu.memory_space<vmem>>, vector<8x1xf32>,
        %cst_51 = arith.constant 0.000000e+00 : f32
        %76 = vector.broadcast %cst_51 : f32 to vector<8x1xf32>
        %c0_52 = arith.constant 0 : index
        %c0_53 = arith.constant 0 : index
        %77 = vector.load %arg11[%c0_52, %c0_53] : memref<8x1xf32, #tpu.memory_space<vmem>>, vector<8x1xf32>
        tpu.vector_store %arg11[%c0_52, %c0_53], %76 {strides = array<i32>} : memref<8x1xf32, #tpu.memory_space<vmem>>, vector<8x1xf32>,
      } else {
      }
      %c0_34 = arith.constant 0 : index
      %c0_35 = arith.constant 0 : index
      %57 = vector.load %arg6[%c0_34, %c0_35] : memref<1x128xf32, #tpu.memory_space<vmem>>, vector<1x128xf32>
      %58 = vector.broadcast %57 : vector<1x128xf32> to vector<8x128xf32>
      %59 = arith.mulf %47, %58 : vector<8x128xf32>
      %c0_36 = arith.constant 0 : index
      %c0_37 = arith.constant 0 : index
      %60 = vector.load %arg10[%c0_36, %c0_37] : memref<8x1xf32, #tpu.memory_space<vmem>>, vector<8x1xf32>
      %cst_38 = arith.constant dense<0.000000e+00> : vector<8xf32>
      %61 = vector.multi_reduction <add>, %59, %cst_38 [1] : vector<8x128xf32> to vector<8xf32>
      %62 = vector.shape_cast %61 : vector<8xf32> to vector<8x1xf32>
      %63 = arith.addf %60, %62 : vector<8x1xf32>
      %c0_39 = arith.constant 0 : index
      %c0_40 = arith.constant 0 : index
      %64 = vector.load %arg10[%c0_39, %c0_40] : memref<8x1xf32, #tpu.memory_space<vmem>>, vector<8x1xf32>
      tpu.vector_store %arg10[%c0_39, %c0_40], %63 {strides = array<i32>} : memref<8x1xf32, #tpu.memory_space<vmem>>, vector<8x1xf32>,
      %c0_41 = arith.constant 0 : index
      %c0_42 = arith.constant 0 : index
      %65 = vector.load %arg11[%c0_41, %c0_42] : memref<8x1xf32, #tpu.memory_space<vmem>>, vector<8x1xf32>
      %66 = arith.mulf %59, %47 : vector<8x128xf32>
      %cst_43 = arith.constant dense<0.000000e+00> : vector<8xf32>
      %67 = vector.multi_reduction <add>, %66, %cst_43 [1] : vector<8x128xf32> to vector<8xf32>
      %68 = vector.shape_cast %67 : vector<8xf32> to vector<8x1xf32>
      %69 = arith.addf %65, %68 : vector<8x1xf32>
      %c0_44 = arith.constant 0 : index
      %c0_45 = arith.constant 0 : index
      %70 = vector.load %arg11[%c0_44, %c0_45] : memref<8x1xf32, #tpu.memory_space<vmem>>, vector<8x1xf32>
      tpu.vector_store %arg11[%c0_44, %c0_45], %69 {strides = array<i32>} : memref<8x1xf32, #tpu.memory_space<vmem>>, vector<8x1xf32>,
      %c0_i32_46 = arith.constant 0 : i32
      %71 = arith.cmpi eq, %arg3, %c0_i32_46 : i32
      %72 = arith.extui %71 : i1 to i32
      %c0_i32_47 = arith.constant 0 : i32
      %73 = arith.cmpi ne, %72, %c0_i32_47 : i32
      scf.if %73 {
        %c0_48 = arith.constant 0 : index
        %c0_49 = arith.constant 0 : index
        %74 = vector.load %arg10[%c0_48, %c0_49] : memref<8x1xf32, #tpu.memory_space<vmem>>, vector<8x1xf32>
        %cst_50 = arith.constant 1.562500e-02 : f32
        %75 = vector.broadcast %cst_50 : f32 to vector<8x1xf32>
        %76 = arith.mulf %74, %75 : vector<8x1xf32>
        %c0_51 = arith.constant 0 : index
        %c0_52 = arith.constant 0 : index
        %77 = vector.load %arg11[%c0_51, %c0_52] : memref<8x1xf32, #tpu.memory_space<vmem>>, vector<8x1xf32>
        %cst_53 = arith.constant 1.562500e-02 : f32
        %78 = vector.broadcast %cst_53 : f32 to vector<8x1xf32>
        %79 = arith.mulf %77, %78 : vector<8x1xf32>
        %80 = arith.mulf %76, %76 : vector<8x1xf32>
        %81 = arith.subf %79, %80 : vector<8x1xf32>
        %cst_54 = arith.constant 0.000000e+00 : f32
        %82 = vector.broadcast %cst_54 : f32 to vector<8x1xf32>
        %83 = arith.maximumf %81, %82 : vector<8x1xf32>
        %c0_55 = arith.constant 0 : index
        %c0_56 = arith.constant 0 : index
        %84 = vector.load %arg10[%c0_55, %c0_56] : memref<8x1xf32, #tpu.memory_space<vmem>>, vector<8x1xf32>
        tpu.vector_store %arg10[%c0_55, %c0_56], %76 {strides = array<i32>} : memref<8x1xf32, #tpu.memory_space<vmem>>, vector<8x1xf32>,
        %cst_57 = arith.constant 9.99999974E-6 : f32
        %85 = vector.broadcast %cst_57 : f32 to vector<8x1xf32>
        %86 = arith.addf %83, %85 : vector<8x1xf32>
        %87 = math.rsqrt %86 : vector<8x1xf32>
        %c0_58 = arith.constant 0 : index
        %c0_59 = arith.constant 0 : index
        %88 = vector.load %arg11[%c0_58, %c0_59] : memref<8x1xf32, #tpu.memory_space<vmem>>, vector<8x1xf32>
        tpu.vector_store %arg11[%c0_58, %c0_59], %87 {strides = array<i32>} : memref<8x1xf32, #tpu.memory_space<vmem>>, vector<8x1xf32>,
      } else {
      }
    } else {
    }
    %c1_i32_30 = arith.constant 1 : i32
    %51 = arith.cmpi eq, %arg2, %c1_i32_30 : i32
    %52 = arith.extui %51 : i1 to i32
    %c0_i32_31 = arith.constant 0 : i32
    %53 = arith.cmpi ne, %52, %c0_i32_31 : i32
    scf.if %53 {
      %c0_32 = arith.constant 0 : index
      %c0_33 = arith.constant 0 : index
      %54 = vector.load %arg10[%c0_32, %c0_33] : memref<8x1xf32, #tpu.memory_space<vmem>>, vector<8x1xf32>
      %55 = vector.broadcast %54 : vector<8x1xf32> to vector<8x128xf32>
      %56 = arith.subf %47, %55 : vector<8x128xf32>
      %c0_34 = arith.constant 0 : index
      %c0_35 = arith.constant 0 : index
      %57 = vector.load %arg11[%c0_34, %c0_35] : memref<8x1xf32, #tpu.memory_space<vmem>>, vector<8x1xf32>
      %58 = vector.broadcast %57 : vector<8x1xf32> to vector<8x128xf32>
      %59 = arith.mulf %56, %58 : vector<8x128xf32>
      %60 = arith.truncf %59 : vector<8x128xf32> to vector<8x128xbf16>
      %c0_36 = arith.constant 0 : index
      %c0_37 = arith.constant 0 : index
      %c0_38 = arith.constant 0 : index
      %61 = vector.load %arg7[%c0_36, %c0_37, %c0_38] : memref<1x8x128xbf16, #tpu.memory_space<vmem>>, vector<1x8x128xbf16>
      %62 = vector.shape_cast %61 : vector<1x8x128xbf16> to vector<8x128xbf16>
      %63 = vector.shape_cast %60 : vector<8x128xbf16> to vector<1x8x128xbf16>
      tpu.vector_store %arg7[%c0_36, %c0_37, %c0_38], %63 {strides = array<i32>} : memref<1x8x128xbf16, #tpu.memory_space<vmem>>, vector<1x8x128xbf16>,
    } else {
    }
    return
  }
  func.func @transform_0(%arg0: i32, %arg1: i32, %arg2: i32, %arg3: i32) -> (i32, i32, i32, i32) {
    %c0_i32 = arith.constant 0 : i32
    %c0_i32_0 = arith.constant 0 : i32
    %c0_i32_1 = arith.constant 0 : i32
    %c0_i32_2 = arith.constant 0 : i32
    return %arg0, %c0_i32, %c0_i32_0, %c0_i32_1 : i32, i32, i32, i32
  }
  func.func @transform_1(%arg0: i32, %arg1: i32, %arg2: i32, %arg3: i32) -> (i32, i32) {
    %c0_i32 = arith.constant 0 : i32
    %c0_i32_0 = arith.constant 0 : i32
    return %arg1, %c0_i32 : i32, i32
  }
  func.func @transform_2(%arg0: i32, %arg1: i32, %arg2: i32, %arg3: i32) -> (i32, i32) {
    %c0_i32 = arith.constant 0 : i32
    %c0_i32_0 = arith.constant 0 : i32
    return %c0_i32, %arg3 : i32, i32
  }
  func.func @transform_3(%arg0: i32, %arg1: i32, %arg2: i32, %arg3: i32) -> (i32, i32, i32) {
    %0 = arith.muli %arg3, %arg2 : i32
    %c0_i32 = arith.constant 0 : i32
    return %arg0, %arg1, %0 : i32, i32, i32
  }
}

</mosaic_0001>

<llo_original>
// kernel: tpu_custom_call.1
$region0: #{tpu_custom_call.1}
  #allocation0 [shape = 'u32[]', space=smem, size = 0x4, offset = 0x4, fixed_abs, tag = 'smem constant byte address 0x4 - core index']
  #allocation1 [shape = 'u32[144,128]{1,0:T(1,128)}', space=vmem, size = 0x12000, scoped, tag = 'internal scratch']
  #allocation2 [shape = 'bf16[4,16,256]{2,1,0:T(16,128)(2,1)}', space=vmem, size = 0x8000, scoped, tag = 'scratch operand']
  #allocation3 [shape = 'bf16[144,128]{1,0:T(16,128)(2,1)}', space=vmem, size = 0x9000, scoped, tag = 'scratch operand']
  #allocation4 [shape = 'f32[8,1]{1,0:T(8,128)}', space=vmem, size = 0x1000, scoped, tag = 'scratch operand']
  #allocation5 [shape = 'f32[8,1]{1,0:T(8,128)}', space=vmem, size = 0x1000, scoped, tag = 'scratch operand']
  %s0 = inlined_call_operand.hbm [shape: bf16[2,4,16,256], index: 0, kind: input, shape index: {}]
  %s1 = inlined_call_operand.hbm [shape: bf16[8,144], index: 1, kind: input, shape index: {}]
  %s2 = inlined_call_operand.vmem [shape: f32[1,128], index: 2, kind: input, shape index: {}]
  %s3 = inlined_call_operand.hbm [shape: bf16[2,8,128], index: 3, kind: output, shape index: {}]
  %s4 = sld [smem:[#allocation0]]
  $region73: #{tpu_custom_call.1} parent=0
    _
  %s6 = ssub.s32 1, %s4
  %s7 = scalar_select 0, %s6, %s4
  $region1: #{tpu_custom_call.1} parent=0
    #allocation6 [shape = 'u8[65536]{0}', space=vmem, size = 0x10000, scoped, tag = 'input window, operand 0']
    #allocation7 [shape = 's32[2]{0}', space=sflag, size = 0x8, scoped, tag = 'scoped memory for tpu_custom_call.1']
    #allocation8 [shape = 's32[2]{0}', space=sflag, size = 0x8, scoped, tag = 'scoped memory for tpu_custom_call.1']
    #allocation9 [shape = 'u8[4096]{0}', space=vmem, size = 0x1000, scoped, tag = 'input window, operand 1, single buffered']
    #allocation10 [shape = 's32[1]{0}', space=sflag, size = 0x4, scoped, tag = 'scoped memory for tpu_custom_call.1']
    #allocation11 [shape = 'u8[4096]{0}', space=vmem, size = 0x1000, scoped, tag = 'output window, operand 0']
    %8 = vsyncpa [#allocation7], 0
    %s9 = scalar_lea.sflag [#allocation7], 1
    %10 = vsyncpa %s9, 0
    %11 = vsyncpa [#allocation10], 0
    %12 = vsyncpa [#allocation8], 0
    %s13 = scalar_lea.sflag [#allocation8], 1
    %14 = vsyncpa %s13, 0
    loop: start=0, step=1, limit=6
    $region2: #{tpu_custom_call.1} parent=1 // loop_pre_header
      _
    $region3: #{tpu_custom_call.1} parent=1 // loop_header
      %s16 = sphi 0, %s20
      %p17 = scmp.ge.s32.totalorder %s16, 6
      %s23 = sphi 0, %s49
      %s24 = sphi 0, %s45
      %s25 = sphi 0, %s41
      %s26 = sphi 0, %s37
      %s27 = sphi 0, %s23
      %s28 = sphi 0, %s24
      %s29 = sphi 0, %s25
      %s30 = sphi 0, %s26
      %s31 = sphi 0, %s27
      %s32 = sphi 0, %s28
      %s33 = sphi 0, %s29
      %s34 = sphi 0, %s30
      %s52 = sphi 0, %s54
      %s55 = sphi 0, %s52
      %s56 = sphi 0, %s55
      %s72 = sphi 0, %s56
      %s78 = sphi 0, %s80
      %s81 = sphi 0, %s78
      %s82 = sphi 0, %s81
      %s98 = sphi 0, %s82
      %s104 = sphi 0, %s106
      %s107 = sphi 0, %s104
      %s108 = sphi 0, %s107
      %s124 = sphi 0, %s108
      %s136 = sphi 0, %s138
      %s139 = sphi 0, %s136
      %s140 = sphi 0, %s139
      %s156 = sphi 0, %s140
    $region4: #{tpu_custom_call.1} parent=1 // loop_header_branch
      %19 = sbr.rel (%p17) target = $region8
    $region5: #{tpu_custom_call.1} parent=1 // loop_body
      %s21 = ssub.s32 %s16, 1
      %s22 = ssub.s32 %s16, 2
      %s35 = sadd.s32 1, %s26
      %p36 = scmp.ge.s32.totalorder %s35, 1
      %s37 = scalar_select %p36, 0, %s35
      %s38 = sadd.s32 1, %s25
      %s39 = scalar_select %p36, %s38, %s25
      %p40 = scmp.ge.s32.totalorder %s39, 2
      %s41 = scalar_select %p40, 0, %s39
      %s42 = sadd.s32 1, %s24
      %s43 = scalar_select %p40, %s42, %s24
      %p44 = scmp.ge.s32.totalorder %s43, 1
      %s45 = scalar_select %p44, 0, %s43
      %s46 = sadd.s32 1, %s23
      %s47 = scalar_select %p44, %s46, %s23
      %p48 = scmp.ge.s32.totalorder %s47, 2
      %s49 = scalar_select %p48, 0, %s47
      %s50 = ssub.s32 %s23, %s49
      %p51 = scmp.eq.s32.totalorder %s50, 0
      %s53 = sadd.s32 %s52, 1
      %s54 = scalar_select %p51, %s52, %s53
      %p57 = pneg %p51
      %p58 = scmp.eq.s32.totalorder %s16, 3
      %p59 = por %p57, %p58
      %p60 = scmp.ne.s32.totalorder %s52, %s55
      %p61 = scmp.eq.s32.totalorder %s16, 0
      %p62 = por %p60, %p61
      %p63 = scmp.ne.s32.totalorder %s52, %s55
      %p64 = scmp.eq.s32.totalorder %s21, 3
      %p65 = por %p63, %p64
      %p66 = scmp.ne.s32.totalorder %s55, %s56
      %p67 = scmp.eq.s32.totalorder %s21, 0
      %p68 = por %p66, %p67
      %p69 = scmp.ne.s32.totalorder %s55, %s56
      %p70 = scmp.eq.s32.totalorder %s22, 3
      %p71 = por %p69, %p70
      %p73 = scmp.ne.s32.totalorder %s56, %s72
      %p74 = scmp.eq.s32.totalorder %s22, 0
      %p75 = por %p73, %p74
      %s76 = ssub.s32 %s24, %s45
      %p77 = scmp.eq.s32.totalorder %s76, 0
      %s79 = sadd.s32 %s78, 1
      %s80 = scalar_select %p77, %s78, %s79
      %p83 = pneg %p77
      %p84 = scmp.eq.s32.totalorder %s16, 3
      %p85 = por %p83, %p84
      %p86 = scmp.ne.s32.totalorder %s78, %s81
      %p87 = scmp.eq.s32.totalorder %s16, 0
      %p88 = por %p86, %p87
      %p89 = scmp.ne.s32.totalorder %s78, %s81
      %p90 = scmp.eq.s32.totalorder %s21, 3
      %p91 = por %p89, %p90
      %p92 = scmp.ne.s32.totalorder %s81, %s82
      %p93 = scmp.eq.s32.totalorder %s21, 0
      %p94 = por %p92, %p93
      %p95 = scmp.ne.s32.totalorder %s81, %s82
      %p96 = scmp.eq.s32.totalorder %s22, 3
      %p97 = por %p95, %p96
      %p99 = scmp.ne.s32.totalorder %s82, %s98
      %p100 = scmp.eq.s32.totalorder %s22, 0
      %p101 = por %p99, %p100
      %s102 = ssub.s32 %s26, %s37
      %p103 = scmp.eq.s32.totalorder %s102, 0
      %s105 = sadd.s32 %s104, 1
      %s106 = scalar_select %p103, %s104, %s105
      %p109 = pneg %p103
      %p110 = scmp.eq.s32.totalorder %s16, 3
      %p111 = por %p109, %p110
      %p112 = scmp.ne.s32.totalorder %s104, %s107
      %p113 = scmp.eq.s32.totalorder %s16, 0
      %p114 = por %p112, %p113
      %p115 = scmp.ne.s32.totalorder %s104, %s107
      %p116 = scmp.eq.s32.totalorder %s21, 3
      %p117 = por %p115, %p116
      %p118 = scmp.ne.s32.totalorder %s107, %s108
      %p119 = scmp.eq.s32.totalorder %s21, 0
      %p120 = por %p118, %p119
      %p121 = scmp.ne.s32.totalorder %s107, %s108
      %p122 = scmp.eq.s32.totalorder %s22, 3
      %p123 = por %p121, %p122
      %p125 = scmp.ne.s32.totalorder %s108, %s124
      %p126 = scmp.eq.s32.totalorder %s22, 0
      %p127 = por %p125, %p126
      %s128 = smul.u32 %s26, %s25
      %s129 = smul.u32 %s37, %s41
      %s130 = ssub.s32 %s23, %s49
      %s131 = ssub.s32 %s24, %s45
      %s132 = sor.u32 %s130, %s131
      %s133 = ssub.s32 %s128, %s129
      %s134 = sor.u32 %s132, %s133
      %p135 = scmp.eq.s32.totalorder %s134, 0
      %s137 = sadd.s32 %s136, 1
      %s138 = scalar_select %p135, %s136, %s137
      %p141 = pneg %p135
      %p142 = scmp.eq.s32.totalorder %s16, 3
      %p143 = por %p141, %p142
      %p144 = scmp.ne.s32.totalorder %s136, %s139
      %p145 = scmp.eq.s32.totalorder %s16, 0
      %p146 = por %p144, %p145
      %p147 = scmp.ne.s32.totalorder %s136, %s139
      %p148 = scmp.eq.s32.totalorder %s21, 3
      %p149 = por %p147, %p148
      %p150 = scmp.ne.s32.totalorder %s139, %s140
      %p151 = scmp.eq.s32.totalorder %s21, 0
      %p152 = por %p150, %p151
      %p153 = scmp.ne.s32.totalorder %s139, %s140
      %p154 = scmp.eq.s32.totalorder %s22, 3
      %p155 = por %p153, %p154
      %p157 = scmp.ne.s32.totalorder %s140, %s156
      %p158 = scmp.eq.s32.totalorder %s22, 0
      %p159 = por %p157, %p158
      %p160 = scmp.le.s32.totalorder 1, %s16
      %p161 = scmp.lt.s32.totalorder %s16, 5
      %p162 = pnand %p160, %p161
      %p163 = pneg %p162
      // Predicated region
      $region9: #{tpu_custom_call.1} parent=5 // pred_check
        _
      $region10: #{tpu_custom_call.1} parent=5 // pred_check_branch
        %165 = sbr.rel (%p162) target = $region12
      $region11: #{tpu_custom_call.1} parent=5 // pred_region
        %s166 = ssub.s32 %s16, 1
        // Predicated region
        $region13: #{tpu_custom_call.1} parent=11 // pred_check
          %p167 = pneg %p94
        $region14: #{tpu_custom_call.1} parent=11 // pred_check_branch
          %169 = sbr.rel (%p167) target = $region16
        $region15: #{tpu_custom_call.1} parent=11 // pred_region
          %s171 = ssub.s32 128, 128
          %172 = vsyncadd [#allocation10], %s171
          %s173 = smul.addr %s28, 2
          %s174 = smul.addr %s173, 64
          %s175 = scalar_lea.hbm %s1, %s174
          %s177 = sshll.u32 [#allocation9], 4
          %s178 = int_to_ptr.vmem [resolvable:$true] %s177
          %180 = dma.hbm_to_vmem [thread:$0]  %s175, 128, %s178, [#allocation10]
        $region16: #{tpu_custom_call.1} parent=11 // pred_fallthru
          _
        // Predicated region
        $region17: #{tpu_custom_call.1} parent=11 // pred_check
          %p181 = pneg %p120
        $region18: #{tpu_custom_call.1} parent=11 // pred_check_branch
          %183 = sbr.rel (%p181) target = $region20
        $region19: #{tpu_custom_call.1} parent=11 // pred_region
          %p184 = scmp.lt.s32.totalorder %s30, 0
          %s185 = scalar_select %p184, %s30, 0
          %s186 = scalar_lea.vmem %s2, %s185
        $region20: #{tpu_custom_call.1} parent=11 // pred_fallthru
          _
      $region12: #{tpu_custom_call.1} parent=5 // pred_fallthru
        _
      %p187 = scmp.lt.s32.totalorder %s16, 4
      // Predicated region
      $region21: #{tpu_custom_call.1} parent=5 // pred_check
        %p188 = pneg %p187
      $region22: #{tpu_custom_call.1} parent=5 // pred_check_branch
        %190 = sbr.rel (%p188) target = $region24
      $region23: #{tpu_custom_call.1} parent=5 // pred_region
        // Predicated region
        $region25: #{tpu_custom_call.1} parent=23 // pred_check
          %p191 = pneg %p62
        $region26: #{tpu_custom_call.1} parent=23 // pred_check_branch
          %193 = sbr.rel (%p191) target = $region28
        $region27: #{tpu_custom_call.1} parent=23 // pred_region
          %s194 = sand.u32 %s52, 1
          %s195 = scalar_lea.sflag [#allocation7], %s194
          %s196 = sand.u32 %s52, 1
          %s197 = smul.addr %s196, 64
          %s198 = scalar_lea.vmem [#allocation6], %s197
          %s200 = ssub.s32 1024, 1024
          %201 = vsyncadd %s195, %s200
          %s202 = smul.addr %s23, 16
          %s203 = smul.addr %s202, 64
          %s204 = scalar_lea.hbm %s0, %s203
          %s205 = sshll.u32 %s198, 4
          %s206 = int_to_ptr.vmem [resolvable:$true] %s205
          %211 = dma.hbm_to_vmem [thread:$0]  %s204, 1024, %s206, %s195, 128, 128, 8
        $region28: #{tpu_custom_call.1} parent=23 // pred_fallthru
          _
      $region24: #{tpu_custom_call.1} parent=5 // pred_fallthru
        _
      %p212 = scmp.le.s32.totalorder 1, %s16
      %p213 = scmp.lt.s32.totalorder %s16, 5
      %p214 = pnand %p212, %p213
      %p215 = pneg %p214
      // Predicated region
      $region29: #{tpu_custom_call.1} parent=5 // pred_check
        _
      $region30: #{tpu_custom_call.1} parent=5 // pred_check_branch
        %217 = sbr.rel (%p214) target = $region32
      $region31: #{tpu_custom_call.1} parent=5 // pred_region
        %s218 = ssub.s32 %s16, 1
        %s219 = sand.u32 %s55, 1
        %s220 = scalar_lea.sflag [#allocation7], %s219
        %s221 = sand.u32 %s55, 1
        %s222 = smul.addr %s221, 64
        %s223 = scalar_lea.vmem [#allocation6], %s222
        // Predicated region
        $region33: #{tpu_custom_call.1} parent=31 // pred_check
          %p224 = pneg %p68
        $region34: #{tpu_custom_call.1} parent=31 // pred_check_branch
          %226 = sbr.rel (%p224) target = $region36
        $region35: #{tpu_custom_call.1} parent=31 // pred_region
          %227 = dma.done %s220, 1024
        $region36: #{tpu_custom_call.1} parent=31 // pred_fallthru
          _
        // Predicated region
        $region37: #{tpu_custom_call.1} parent=31 // pred_check
          %p228 = pneg %p94
        $region38: #{tpu_custom_call.1} parent=31 // pred_check_branch
          %230 = sbr.rel (%p228) target = $region40
        $region39: #{tpu_custom_call.1} parent=31 // pred_region
          %231 = dma.done [#allocation10], 128
        $region40: #{tpu_custom_call.1} parent=31 // pred_fallthru
          _
        %s232 = sand.u32 %s55, 1
        %s233 = scalar_lea.sflag [#allocation7], %s232
        %s234 = sand.u32 %s55, 1
        %s235 = smul.addr %s234, 64
        %s236 = scalar_lea.vmem [#allocation6], %s235
        %p237 = pneg %p68
        %p238 = pneg %p65
        %p239 = pneg %p94
        %p240 = pneg %p91
        %p241 = scmp.lt.s32.totalorder %s30, 0
        %s242 = scalar_select %p241, %s30, 0
        %s243 = scalar_lea.vmem %s2, %s242
        %p244 = pneg %p120
        %p245 = pneg %p117
        %p246 = pneg %p152
        %p247 = pneg %p149
        %s248 = sand.u32 %s139, 1
        %s249 = scalar_lea.sflag [#allocation8], %s248
        %s250 = sand.u32 %s139, 1
        %s251 = smul.addr %s250, 4
        %s252 = scalar_lea.vmem [#allocation11], %s251
        %p253 = scmp.lt.s32.totalorder %s30, 0
        %s254 = scalar_select %p253, %s30, 0
        %s255 = scalar_lea.vmem %s2, %s254
        %s256 = smul.u32 %s30, %s29
        %p259 = scmp.eq.s32.totalorder %s28, 0
        %p260 = scmp.eq.s32.totalorder %s29, 0
        %p261 = pnand %p259, %p260
        %p262 = pneg %p261
        %p263 = scmp.eq.s32.totalorder %s30, 0
        %p264 = pnand %p262, %p263
        %p265 = pneg %p264
        // Predicated region
        $region41: #{tpu_custom_call.1} parent=31 // pred_check
          _
        $region42: #{tpu_custom_call.1} parent=31 // pred_check_branch
          %267 = sbr.rel (%p264) target = $region44
        $region43: #{tpu_custom_call.1} parent=31 // pred_region
          %v268 = vld [vmem:[%s223] sm:$0xff]
          %v269 = vld [vmem:[%s223 + $0x8] sm:$0xff]
          %v270 = vmul.bf16 %v268, 1045249613
          %v271 = vmul.bf16 %v269, 1045249613
          %v272 = vmax.bf16 %v268, %v270
          %v273 = vmax.bf16 %v269, %v271
          %v276 = vunpack.c.l.b16 %v272
          %v277 = vunpack.c.h.b16 %v272
          %v278 = vunpack.c.l.b16 %v273
          %v279 = vunpack.c.h.b16 %v273
          %v280 = vpack.c.b16 %v278, %v276
          %v281 = vpack.c.b16 %v279, %v277
          %284 = vst [vmem:[#allocation2] sm:$0xff] %v280
          %285 = vst [vmem:[#allocation2 + $0x8] sm:$0xff] %v281
          %s286 = scalar_lea.vmem %s223, 16 [#allocation6]
          %v287 = vld [vmem:[%s286] sm:$0xff]
          %v288 = vld [vmem:[%s286 + $0x8] sm:$0xff]
          %v289 = vmul.bf16 %v287, 1045249613
          %v290 = vmul.bf16 %v288, 1045249613
          %v291 = vmax.bf16 %v287, %v289
          %v292 = vmax.bf16 %v288, %v290
          %v295 = vunpack.c.l.b16 %v291
          %v296 = vunpack.c.h.b16 %v291
          %v297 = vunpack.c.l.b16 %v292
          %v298 = vunpack.c.h.b16 %v292
          %v299 = vpack.c.b16 %v297, %v295
          %v300 = vpack.c.b16 %v298, %v296
          %s303 = scalar_lea.vmem [#allocation2], 16
          %304 = vst [vmem:[%s303] sm:$0xff] %v299
          %305 = vst [vmem:[%s303 + $0x8] sm:$0xff] %v300
          %s306 = scalar_lea.vmem %s223, 32 [#allocation6]
          %v307 = vld [vmem:[%s306] sm:$0xff]
          %v308 = vld [vmem:[%s306 + $0x8] sm:$0xff]
          %v309 = vmul.bf16 %v307, 1045249613
          %v310 = vmul.bf16 %v308, 1045249613
          %v311 = vmax.bf16 %v307, %v309
          %v312 = vmax.bf16 %v308, %v310
          %v315 = vunpack.c.l.b16 %v311
          %v316 = vunpack.c.h.b16 %v311
          %v317 = vunpack.c.l.b16 %v312
          %v318 = vunpack.c.h.b16 %v312
          %v319 = vpack.c.b16 %v317, %v315
          %v320 = vpack.c.b16 %v318, %v316
          %s323 = scalar_lea.vmem [#allocation2], 32
          %324 = vst [vmem:[%s323] sm:$0xff] %v319
          %325 = vst [vmem:[%s323 + $0x8] sm:$0xff] %v320
          %s326 = scalar_lea.vmem %s223, 48 [#allocation6]
          %v327 = vld [vmem:[%s326] sm:$0xff]
          %v328 = vld [vmem:[%s326 + $0x8] sm:$0xff]
          %v329 = vmul.bf16 %v327, 1045249613
          %v330 = vmul.bf16 %v328, 1045249613
          %v331 = vmax.bf16 %v327, %v329
          %v332 = vmax.bf16 %v328, %v330
          %v335 = vunpack.c.l.b16 %v331
          %v336 = vunpack.c.h.b16 %v331
          %v337 = vunpack.c.l.b16 %v332
          %v338 = vunpack.c.h.b16 %v332
          %v339 = vpack.c.b16 %v337, %v335
          %v340 = vpack.c.b16 %v338, %v336
          %s343 = scalar_lea.vmem [#allocation2], 48
          %344 = vst [vmem:[%s343] sm:$0xff] %v339
          %345 = vst [vmem:[%s343 + $0x8] sm:$0xff] %v340
        $region44: #{tpu_custom_call.1} parent=31 // pred_fallthru
          _
        %s346 = smul.u32 %s30, 4
        %s347 = smul.u32 %s346, 2
        %s348 = smul.addr %s347, 8
        %s349 = scalar_lea.vmem [#allocation2], %s348
        %v350 = vld [vmem:[%s349] sm:$0xff]
        %v351 = vld [vmem:[%s349 + $0x8] sm:$0xff]
        %352 = vst [vmem:[#allocation3] sm:$0xff] %v350
        %355 = vrot.lane.b32.xlu0 %v350, 127
        %v356 = vpop.permute.xlu0 %355
        %357 = vrot.lane.b32.xlu0 %v351, 127
        %v358 = vpop.permute.xlu0 %357
        %vm359 = vcmask 1039360
        %v360 = vsel %vm359, %v356, %v358
        %362 = vst [vmem:[#allocation3 + $0x10] sm:$0xff] %v360
        %363 = vrot.lane.b32.xlu0 %v350, 119
        %v364 = vpop.permute.xlu0 %363
        %365 = vrot.lane.b32.xlu0 %v351, 119
        %v366 = vpop.permute.xlu0 %365
        %vm367 = vcmask 973824
        %v368 = vsel %vm367, %v364, %v366
        %370 = vst [vmem:[#allocation3 + $0x30] sm:$0xff] %v368
        %371 = vrot.lane.b32.xlu0 %v350, 118
        %v372 = vpop.permute.xlu0 %371
        %373 = vrot.lane.b32.xlu0 %v351, 118
        %v374 = vpop.permute.xlu0 %373
        %vm375 = vcmask 965632
        %v376 = vsel %vm375, %v372, %v374
        %378 = vst [vmem:[#allocation3 + $0x40] sm:$0xff] %v376
        %s379 = sadd.s32 %s346, 1
        %s380 = smul.u32 %s379, 2
        %s381 = smul.addr %s380, 8
        %s382 = scalar_lea.vmem [#allocation2], %s381
        %v383 = vld [vmem:[%s382] sm:$0xff]
        %v384 = vld [vmem:[%s382 + $0x8] sm:$0xff]
        %385 = vst [vmem:[#allocation3 + $0x8] sm:$0xff] %v383
        %388 = vrot.lane.b32.xlu0 %v383, 119
        %v389 = vpop.permute.xlu0 %388
        %390 = vrot.lane.b32.xlu0 %v384, 119
        %v391 = vpop.permute.xlu0 %390
        %v392 = vsel %vm367, %v389, %v391
        %394 = vst [vmem:[#allocation3 + $0x38] sm:$0xff] %v392
        %s395 = sadd.s32 %s346, 2
        %s396 = smul.u32 %s395, 2
        %s397 = smul.addr %s396, 8
        %s398 = scalar_lea.vmem [#allocation2], %s397
        %v399 = vld [vmem:[%s398] sm:$0xff]
        %v400 = vld [vmem:[%s398 + $0x8] sm:$0xff]
        %401 = vst [vmem:[#allocation3 + $0x18] sm:$0xff] %v399
        %404 = vrot.lane.b32.xlu0 %v399, 127
        %v405 = vpop.permute.xlu0 %404
        %406 = vrot.lane.b32.xlu0 %v400, 127
        %v407 = vpop.permute.xlu0 %406
        %v408 = vsel %vm359, %v405, %v407
        %410 = vst [vmem:[#allocation3 + $0x28] sm:$0xff] %v408
        %s411 = sadd.s32 %s346, 3
        %s412 = smul.u32 %s411, 2
        %s413 = smul.addr %s412, 8
        %s414 = scalar_lea.vmem [#allocation2], %s413
        %v415 = vld [vmem:[%s414] sm:$0xff]
        %416 = vst [vmem:[#allocation3 + $0x20] sm:$0xff] %v415
        %v417 = vld [vmem:[#allocation9] sm:$0xff]
        %v418 = vld [vmem:[#allocation3] sm:$0xff]
        %v419 = vld [vmem:[#allocation3 + $0x8] sm:$0xff]
        %v420 = vld [vmem:[#allocation3 + $0x10] sm:$0xff]
        %v421 = vld [vmem:[#allocation3 + $0x18] sm:$0xff]
        %v422 = vld [vmem:[#allocation3 + $0x20] sm:$0xff]
        %v423 = vld [vmem:[#allocation3 + $0x28] sm:$0xff]
        %v424 = vld [vmem:[#allocation3 + $0x30] sm:$0xff]
        %v425 = vld [vmem:[#allocation3 + $0x38] sm:$0xff]
        %v426 = vld [vmem:[#allocation3 + $0x40] sm:$0xff]
        %v428 = vunpack.c.l.b16 %v417
        %v429 = vunpack.c.h.b16 %v417
        %v430 = vpack.c.b16 %v428, %v428
        %v431 = vpack.c.b16 %v429, %v429
        %vm433 = vcmask 130048
        %v435 = vsel %vm433, %v431, 0
        %437 = vmatprep.subr.bf16.mxu0 0
        %438 = vmatpush1.bf16.msra.mxu0 %v418
        %439 = vmatprep.subr.bf16.mxu0 0
        %440 = vmatpush1.bf16.msra.mxu0 %v419
        %441 = vmatprep.subr.bf16.mxu0 0
        %442 = vmatpush1.bf16.msra.mxu0 %v420
        %443 = vmatprep.subr.bf16.mxu0 0
        %444 = vmatpush1.bf16.msra.mxu0 %v421
        %445 = vmatprep.subr.bf16.mxu0 0
        %446 = vmatpush1.bf16.msra.mxu0 %v422
        %447 = vmatprep.subr.bf16.mxu0 0
        %448 = vmatpush1.bf16.msra.mxu0 %v423
        %449 = vmatprep.subr.bf16.mxu0 0
        %450 = vmatpush1.bf16.msra.mxu0 %v424
        %451 = vmatprep.subr.bf16.mxu0 0
        %452 = vmatpush1.bf16.msra.mxu0 %v425
        %453 = vmatprep.subr.bf16.mxu0 0
        %454 = vmatpush1.bf16.msra.mxu0 %v426
        %455 = vmatprep.subr.bf16.mxu0 0
        %456 = vmatpush1.bf16.msra.mxu0 0
        %457 = vmatprep.subr.bf16.mxu0 0
        %458 = vmatpush1.bf16.msra.mxu0 0
        %459 = vmatprep.subr.bf16.mxu0 0
        %460 = vmatpush1.bf16.msra.mxu0 0
        %461 = vmatprep.subr.bf16.mxu0 0
        %462 = vmatpush1.bf16.msra.mxu0 0
        %463 = vmatprep.subr.bf16.mxu0 0
        %464 = vmatpush1.bf16.msra.mxu0 0
        %465 = vmatprep.subr.bf16.mxu0 0
        %466 = vmatpush1.bf16.msra.mxu0 0
        %467 = vmatprep.subr.bf16.mxu0 0
        %468 = vmatpush1.bf16.msra.mxu0 0
        %469 = vmatprep.mubr.bf16.mxu0 %v435
        %470 = vmatmul.mubr.bf16.gmra.mrb[0].mxu0 %v430
        %v471 = vpop.f32.mrb[0].mxu0
        %v472 = vadd.f32 0.0, %v471
        %v473 = vpop.f32.mrb[0].mxu0
        %v474 = vpop.f32.mrb[0].mxu0
        %v475 = vpop.f32.mrb[0].mxu0
        %476 = vdwg.mxu0
        // Predicated region
        $region45: #{tpu_custom_call.1} parent=31 // pred_check
          %p477 = pneg %p260
        $region46: #{tpu_custom_call.1} parent=31 // pred_check_branch
          %479 = sbr.rel (%p477) target = $region48
        $region47: #{tpu_custom_call.1} parent=31 // pred_region
          // Predicated region
          $region49: #{tpu_custom_call.1} parent=47 // pred_check
            %p480 = pneg %p263
          $region50: #{tpu_custom_call.1} parent=47 // pred_check_branch
            %482 = sbr.rel (%p480) target = $region52
          $region51: #{tpu_custom_call.1} parent=47 // pred_region
            %vm483 = vcmask 7168
            %484 = vst.msk [vmem:[#allocation4] sm:$0xff] %vm483, 0.0
            %485 = vst.msk [vmem:[#allocation5] sm:$0xff] %vm483, 0.0
          $region52: #{tpu_custom_call.1} parent=47 // pred_fallthru
            _
          %v486 = vld [vmem:[%s255] sm:$0x1]
          %v488 = vlaneseq
          %v489 = vshrl.u32 %v488, 7
          %v490 = vsub.s32 0, %v489
          %v491 = vrot.slane %v486, %v490
          %v493 = vmul.f32 %v472, %v491
          %v494 = vld [vmem:[#allocation4] sm:$0xff]
          %495 = vadd.xlane.f32.xlu0 %v493
          %v496 = vpop.xlane.xlu0 %495
          %v497 = vadd.f32 %v494, %v496
          %vm498 = vcmask 7168
          %499 = vst.msk [vmem:[#allocation4] sm:$0xff] %vm498, %v497
          %v500 = vld [vmem:[#allocation5] sm:$0xff]
          %v501 = vmul.f32 %v493, %v472
          %502 = vadd.xlane.f32.xlu0 %v501
          %v503 = vpop.xlane.xlu0 %502
          %v504 = vadd.f32 %v500, %v503
          %505 = vst.msk [vmem:[#allocation5] sm:$0xff] %vm498, %v504
          // Predicated region
          $region53: #{tpu_custom_call.1} parent=47 // pred_check
            %p506 = pneg %p263
          $region54: #{tpu_custom_call.1} parent=47 // pred_check_branch
            %508 = sbr.rel (%p506) target = $region56
          $region55: #{tpu_custom_call.1} parent=47 // pred_region
            %v509 = vld [vmem:[#allocation4] sm:$0xff]
            %v510 = vmul.f32 %v509, 0.015625
            %v511 = vld [vmem:[#allocation5] sm:$0xff]
            %v512 = vmul.f32 %v511, 0.015625
            %v513 = vmul.f32 %v510, %v510
            %v514 = vsub.f32 %v512, %v513
            %v515 = vmax.f32 %v514, 0.0
            %516 = vst.msk [vmem:[#allocation4] sm:$0xff] %vm498, %v510
            %v517 = vadd.f32 %v515, 1e-05
            %v518 = vrsqrt.pop %v517
            %519 = vst.msk [vmem:[#allocation5] sm:$0xff] %vm498, %v518
          $region56: #{tpu_custom_call.1} parent=47 // pred_fallthru
            _
        $region48: #{tpu_custom_call.1} parent=31 // pred_fallthru
          _
        %p520 = scmp.eq.s32.totalorder %s29, 1
        // Predicated region
        $region57: #{tpu_custom_call.1} parent=31 // pred_check
          %p521 = pneg %p520
        $region58: #{tpu_custom_call.1} parent=31 // pred_check_branch
          %523 = sbr.rel (%p521) target = $region60
        $region59: #{tpu_custom_call.1} parent=31 // pred_region
          %v524 = vld [vmem:[#allocation4] sm:$0xff]
          %526 = vset.pattern.permute.xlu0 0
          %527 = vperm.xlu0 %526, %v524
          %v528 = vpop.permute.xlu0 %527
          %v530 = vsub.f32 %v472, %v528
          %v531 = vld [vmem:[#allocation5] sm:$0xff]
          %533 = vset.pattern.permute.xlu0 0
          %534 = vperm.xlu0 %533, %v531
          %v535 = vpop.permute.xlu0 %534
          %v537 = vmul.f32 %v530, %v535
          %v538 = vpack.c.bf16 %v537, %v537
          %539 = vst [vmem:[%s252] sm:$0xf] %v538
        $region60: #{tpu_custom_call.1} parent=31 // pred_fallthru
          _
        %s540 = sand.u32 %s139, 1
        %s541 = scalar_lea.sflag [#allocation8], %s540
        %s542 = sand.u32 %s139, 1
        %s543 = smul.addr %s542, 4
        %s544 = scalar_lea.vmem [#allocation11], %s543
        // Predicated region
        $region61: #{tpu_custom_call.1} parent=31 // pred_check
          %p545 = pneg %p149
        $region62: #{tpu_custom_call.1} parent=31 // pred_check_branch
          %547 = sbr.rel (%p545) target = $region64
        $region63: #{tpu_custom_call.1} parent=31 // pred_region
          %s548 = smul.u32 %s30, %s29
          %s550 = ssub.s32 64, 64
          %551 = vsyncadd %s541, %s550
          %s552 = sadd.s32 %s548, %s28
          %s553 = sadd.s32 %s552, %s27
          %s554 = smul.addr %s553, 64
          %s555 = scalar_lea.hbm %s3, %s554
          %s557 = sshll.u32 %s544, 4
          %s558 = int_to_ptr.vmem [resolvable:$true] %s557
          %560 = dma.vmem_to_hbm [thread:$0]  %s558, 64, %s555, %s541
        $region64: #{tpu_custom_call.1} parent=31 // pred_fallthru
          _
      $region32: #{tpu_custom_call.1} parent=5 // pred_fallthru
        _
      %p561 = scmp.le.s32.totalorder 2, %s16
      // Predicated region
      $region65: #{tpu_custom_call.1} parent=5 // pred_check
        %p562 = pneg %p561
      $region66: #{tpu_custom_call.1} parent=5 // pred_check_branch
        %564 = sbr.rel (%p562) target = $region68
      $region67: #{tpu_custom_call.1} parent=5 // pred_region
        %s565 = ssub.s32 %s16, 2
        // Predicated region
        $region69: #{tpu_custom_call.1} parent=67 // pred_check
          %p566 = pneg %p155
        $region70: #{tpu_custom_call.1} parent=67 // pred_check_branch
          %568 = sbr.rel (%p566) target = $region72
        $region71: #{tpu_custom_call.1} parent=67 // pred_region
          %s569 = sand.u32 %s140, 1
          %s570 = scalar_lea.sflag [#allocation8], %s569
          %s571 = sand.u32 %s140, 1
          %s572 = smul.addr %s571, 4
          %s573 = scalar_lea.vmem [#allocation11], %s572
          %574 = dma.done %s570, 64
        $region72: #{tpu_custom_call.1} parent=67 // pred_fallthru
          _
      $region68: #{tpu_custom_call.1} parent=5 // pred_fallthru
        _
    $region6: #{tpu_custom_call.1} parent=1 // loop_footer
      %s20 = sadd.s32 1, %s16
    $region7: #{tpu_custom_call.1} parent=1 // loop_footer_branch
      %15 = sbr.rel target = $region3
    $region8: #{tpu_custom_call.1} parent=1 // loop_exit
      _
    %575 = vsyncpa [#allocation7], 1
    %s576 = scalar_lea.sflag [#allocation7], 1
    %577 = vsyncpa %s576, 1
    %578 = vsyncpa [#allocation10], 1
    %579 = vsyncpa [#allocation8], 1
    %s580 = scalar_lea.sflag [#allocation8], 1
    %581 = vsyncpa %s580, 1

</llo_original>
